<compile_context>
chip_gen: v5e
topology: v5e:2x2
jax: 0.10.0
libtpu: 0.0.40
codegen_flags: <defaults>
</compile_context>

<pallas_src>
import math
from functools import partial

import jax
import jax.numpy as jnp
from jax.experimental import pallas as pl
from jax.experimental.pallas import tpu as pltpu


def _round_up(v, m):
    return ((v + m - 1) // m) * m


# ---------------------------------------------------------------------------
# Small path: everything fits in VMEM at once -> single block, no grid.
# ---------------------------------------------------------------------------
def _linear_small_kernel(x_ref, w_ref, b_ref, o_ref):
    # x: (Mp, Kp), w: (Kp, Np) (pre-transposed + pre-padded), b: (1, Np) f32
    a = x_ref[...].astype(w_ref.dtype)            # no-op when dtypes match
    acc = jnp.dot(a, w_ref[...], preferred_element_type=jnp.float32)
    o_ref[...] = (acc + b_ref[...]).astype(o_ref.dtype)


# ---------------------------------------------------------------------------
# Tiled path: M/N parallel grid axes, K reduction with f32 VMEM accumulator.
# ---------------------------------------------------------------------------
def _linear_tiled_kernel(x_ref, w_ref, b_ref, o_ref, acc_ref):
    k = pl.program_id(2)

    @pl.when(k == 0)
    def _():
        acc_ref[...] = jnp.zeros_like(acc_ref)

    a = x_ref[...].astype(w_ref.dtype)            # f32 x against bf16 weights
    acc_ref[...] += jnp.dot(a, w_ref[...], preferred_element_type=jnp.float32)

    @pl.when(k == pl.num_programs(2) - 1)
    def _():
        o_ref[...] = (acc_ref[...] + b_ref[...]).astype(o_ref.dtype)


# Footprint (bytes) below which the gridless single-block path is used.
_SMALL_FOOTPRINT_BYTES = 4 * 1024 * 1024


def _gen_tile_config():
    """Generation-aware (TN, TK, vmem_limit) budget."""
    try:
        phys_vmem = int(pltpu.get_tpu_info().vmem_capacity_bytes)
    except Exception:
        phys_vmem = 64 * 1024 * 1024          # conservative: v7x per-TC VMEM
    if phys_vmem >= 96 * 1024 * 1024:
        # v5e / v6e: 128 MiB physical VMEM -> big K/N tiles, fewer HBM passes.
        return dict(tn=1024, tk=2048, vmem_limit=64 * 1024 * 1024)
    # v7x: 64 MiB physical VMEM per TensorCore -> stay well under ~48 MiB.
    return dict(tn=512, tk=1024, vmem_limit=48 * 1024 * 1024)


@partial(jax.jit, static_argnames=("n_out", "k_in", "tn", "tk", "vmem_limit"))
def linear_forward(x, w_pad, b_pad, *, n_out, k_in, tn, tk, vmem_limit):
    """out = x @ W.T + b with W.T pre-padded to (Kp, Np) (layout (in, out))."""
    M, K = x.shape
    assert K == k_in, (K, k_in)
    Kp, Np = w_pad.shape
    out_dtype = x.dtype

    Mp8 = _round_up(M, 8)

    # ---- small path: single fully-VMEM-resident block, no grid -------------
    x_b = jnp.dtype(x.dtype).itemsize
    w_b = jnp.dtype(w_pad.dtype).itemsize
    o_b = jnp.dtype(out_dtype).itemsize
    footprint = Mp8 * Kp * x_b + Kp * Np * w_b + Np * 4 + Mp8 * Np * o_b
    if footprint <= _SMALL_FOOTPRINT_BYTES:
        xp = x if (Mp8 == M and Kp == K) else jnp.pad(
            x, ((0, Mp8 - M), (0, Kp - K)))
        out_p = pl.pallas_call(
            _linear_small_kernel,
            out_shape=jax.ShapeDtypeStruct((Mp8, Np), out_dtype),
            in_specs=[
                pl.BlockSpec(memory_space=pltpu.MemorySpace.VMEM),
                pl.BlockSpec(memory_space=pltpu.MemorySpace.VMEM),
                pl.BlockSpec(memory_space=pltpu.MemorySpace.VMEM),
            ],
            out_specs=pl.BlockSpec(memory_space=pltpu.MemorySpace.VMEM),
        )(xp, w_pad, b_pad)
        if Mp8 == M and Np == n_out:
            return out_p
        return out_p[:M, :n_out]

    # ---- tiled pipeline for realistic sizes --------------------------------
    # TM covers all of M when modest -> the (K,N) weight streams from HBM once.
    TM = min(512, Mp8)                      # multiple of 8
    TN = min(tn, Np)                        # multiple of 128, divides Np
    TK = min(tk, Kp)                        # multiple of 128, divides Kp

    Mp = _round_up(M, TM)

    # Keep >= 2 parallel iterations so v7x's two TensorCores both get work.
    while (Mp // TM) * (Np // TN) < 2 and TN % 256 == 0:
        TN //= 2

    xp = x if (Mp == M and Kp == K) else jnp.pad(x, ((0, Mp - M), (0, Kp - K)))

    cost = pl.CostEstimate(
        flops=2 * M * n_out * k_in,
        transcendentals=0,
        bytes_accessed=(M * K * x_b + Kp * Np * w_b + Np * 4 + M * n_out * o_b),
    )

    # NOTE: if profiles still show exposed weight DMA for small-M (GEMV-like)
    # shapes, pipeline_mode=pl.Buffered(3) on the weight spec is the next knob.
    out_p = pl.pallas_call(
        _linear_tiled_kernel,
        out_shape=jax.ShapeDtypeStruct((Mp, Np), out_dtype),
        grid=(Mp // TM, Np // TN, Kp // TK),
        in_specs=[
            pl.BlockSpec((TM, TK), lambda i, j, k: (i, k)),
            pl.BlockSpec((TK, TN), lambda i, j, k: (k, j)),
            pl.BlockSpec((1, TN), lambda i, j, k: (0, j)),
        ],
        out_specs=pl.BlockSpec((TM, TN), lambda i, j, k: (i, j)),
        scratch_shapes=[pltpu.VMEM((TM, TN), jnp.float32)],
        compiler_params=pltpu.CompilerParams(
            dimension_semantics=("parallel", "parallel", "arbitrary"),
            vmem_limit_bytes=vmem_limit,
        ),
        cost_estimate=cost,
    )(xp, w_pad, b_pad)

    if Mp == M and Np == n_out:
        return out_p
    return out_p[:M, :n_out]


class SoftmaxModule:
    """JAX mirror of the PyTorch `Softmax` module (a plain Linear layer)."""

    def __init__(self, in_size, out_size, key, param_dtype=jnp.float32):
        kw, kb = jax.random.split(key)
        bound = 1.0 / math.sqrt(in_size)
        # PyTorch layout (out, in) kept for the reference check.
        self.weight = jax.random.uniform(
            kw, (out_size, in_size), jnp.float32, minval=-bound, maxval=bound
        )
        self.bias = jax.random.uniform(
            kb, (out_size,), jnp.float32, minval=-bound, maxval=bound
        )
        self.in_size = in_size
        self.out_size = out_size

        cfg = _gen_tile_config()
        self._tn = cfg["tn"]
        self._tk = cfg["tk"]
        self._vmem_limit = cfg["vmem_limit"]

        # One-time transpose + pad of the static parameters (hoisted out of the
        # forward pass). Pad K/N to 128-multiples; round up further to the tile
        # size only when the dimension exceeds one tile, so min(tile, dim)
        # always divides the padded extent.
        Kp = _round_up(in_size, 128)
        if Kp > self._tk:
            Kp = _round_up(Kp, self._tk)
        Np = _round_up(out_size, 128)
        if Np > self._tn:
            Np = _round_up(Np, self._tn)

        w_t = jnp.asarray(self.weight.T, dtype=param_dtype)     # (in, out)
        self.w_pad = jnp.pad(w_t, ((0, Kp - in_size), (0, Np - out_size)))
        self.b_pad = jnp.pad(
            self.bias.astype(jnp.float32), (0, Np - out_size)
        ).reshape(1, Np)

    def __call__(self, x):
        return linear_forward(
            x, self.w_pad, self.b_pad,
            n_out=self.out_size, k_in=self.in_size,
            tn=self._tn, tk=self._tk, vmem_limit=self._vmem_limit,
        )


if __name__ == "__main__":
    # --- toy case matching the PyTorch script: x (3, 2), Linear(2, 3) -------
    key = jax.random.PRNGKey(0)
    x = jnp.array([[1.0, 1.0], [1.0, 2.0], [1.0, 3.0]], dtype=jnp.float32)
    model = SoftmaxModule(2, 3, key)

    out = jax.block_until_ready(model(x))
    ref = x @ model.weight.T + model.bias
    assert out.shape == (3, 3)
    assert jnp.allclose(out, ref, atol=1e-5, rtol=1e-5)

    # --- tiled (pipelined) path, f32 parameters ------------------------------
    k1, k2 = jax.random.split(jax.random.PRNGKey(1))
    big = SoftmaxModule(2048, 1024, k1)
    xb = jax.random.uniform(k2, (512, 2048), jnp.float32, minval=-0.5, maxval=0.5)
    ob = jax.block_until_ready(big(xb))
    refb = xb @ big.weight.T + big.bias
    assert ob.shape == (512, 1024)
    rel_err = jnp.linalg.norm(ob - refb) / jnp.linalg.norm(refb)
    assert rel_err < 1e-3, float(rel_err)

    # --- tiled path with bf16 parameters (halved weight DMA, native MXU rate)
    big_bf16 = SoftmaxModule(2048, 1024, k1, param_dtype=jnp.bfloat16)
    ob16 = jax.block_until_ready(big_bf16(xb))
    rel_err16 = jnp.linalg.norm(ob16 - refb) / jnp.linalg.norm(refb)
    assert ob16.shape == (512, 1024)
    assert rel_err16 < 2e-2, float(rel_err16)

    # NOTE: the PyTorch module named `Softmax` applies no softmax; this mirrors
    # that spec exactly (pure Linear forward).
    print("KERNEL_OK")
</pallas_src>

<mosaic_0001>
module attributes {stable_mosaic.version = 11 : i64} {
  func.func @_linear_small_kernel(%arg0: memref<8x128xf32, #tpu.memory_space<vmem>>, %arg1: memref<128x128xf32, #tpu.memory_space<vmem>>, %arg2: memref<1x128xf32, #tpu.memory_space<vmem>>, %arg3: memref<8x128xf32, #tpu.memory_space<vmem>>) attributes {dimension_semantics = [], scalar_prefetch = 0 : i64, scratch_operands = 0 : i64, tpu.core_type = #tpu.core_type<tc>} {
    %c0 = arith.constant 0 : index
    %c0_0 = arith.constant 0 : index
    %0 = vector.load %arg0[%c0, %c0_0] : memref<8x128xf32, #tpu.memory_space<vmem>>, vector<8x128xf32>
    %c0_1 = arith.constant 0 : index
    %c0_2 = arith.constant 0 : index
    %1 = vector.load %arg1[%c0_1, %c0_2] : memref<128x128xf32, #tpu.memory_space<vmem>>, vector<128x128xf32>
    %cst = arith.constant dense<0.000000e+00> : vector<8x128xf32>
    %2 = tpu.matmul %0, %1, %cst {dimension_numbers = #tpu.dot_dimension_numbers<[1], [0], [0], [1], [0, 0, 1, 1], [], []>} : vector<8x128xf32>, vector<128x128xf32>, vector<8x128xf32> -> vector<8x128xf32>
    %c0_3 = arith.constant 0 : index
    %c0_4 = arith.constant 0 : index
    %3 = vector.load %arg2[%c0_3, %c0_4] : memref<1x128xf32, #tpu.memory_space<vmem>>, vector<1x128xf32>
    %4 = vector.broadcast %3 : vector<1x128xf32> to vector<8x128xf32>
    %5 = arith.addf %2, %4 : vector<8x128xf32>
    %c0_5 = arith.constant 0 : index
    %c0_6 = arith.constant 0 : index
    %6 = vector.load %arg3[%c0_5, %c0_6] : memref<8x128xf32, #tpu.memory_space<vmem>>, vector<8x128xf32>
    tpu.vector_store %arg3[%c0_5, %c0_6], %5 {strides = array<i32>} : memref<8x128xf32, #tpu.memory_space<vmem>>, vector<8x128xf32>,
    return
  }
}

</mosaic_0001>

<llo_original>
// kernel: linear_forward.1
$region0: #{linear_forward.1}
  #allocation0 [shape = 'u32[]', space=smem, size = 0x4, offset = 0x4, fixed_abs, tag = 'smem constant byte address 0x4 - core index']
  #allocation1 [shape = 'u32[72,128]{1,0:T(1,128)}', space=vmem, size = 0x9000, scoped, tag = 'internal scratch']
  %s0 = inlined_call_operand.vmem [shape: f32[8,128], index: 0, kind: input, shape index: {}]
  %s1 = inlined_call_operand.hbm [shape: f32[128,128], index: 1, kind: input, shape index: {}]
  %s2 = inlined_call_operand.vmem [shape: f32[1,128], index: 2, kind: input, shape index: {}]
  %s3 = inlined_call_operand.vmem [shape: f32[8,128], index: 3, kind: output, shape index: {}]
  %s4 = sld [smem:[#allocation0]]
  $region26: #{linear_forward.1} parent=0
    _
  %s6 = ssub.s32 1, %s4
  %s7 = scalar_select 0, %s6, %s4
  $region1: #{linear_forward.1} parent=0
    #allocation2 [shape = 'u8[65536]{0}', space=vmem, size = 0x10000, scoped, tag = 'input window, operand 1, single buffered']
    #allocation3 [shape = 's32[1]{0}', space=sflag, size = 0x4, scoped, tag = 'scoped memory for linear_forward.1']
    %8 = vsyncpa [#allocation3], 0
    // Predicated region
    $region2: #{linear_forward.1} parent=1 // pred_check
      _
    $region3: #{linear_forward.1} parent=1 // pred_check_branch
      %10 = sbr.rel (0) target = $region5
    $region4: #{linear_forward.1} parent=1 // pred_region
      _
    $region5: #{linear_forward.1} parent=1 // pred_fallthru
      _
    // Predicated region
    $region6: #{linear_forward.1} parent=1 // pred_check
      _
    $region7: #{linear_forward.1} parent=1 // pred_check_branch
      %12 = sbr.rel (0) target = $region9
    $region8: #{linear_forward.1} parent=1 // pred_region
      %14 = vsyncadd [#allocation3], 0
      %s15 = sshll.u32 %s1, 4
      %s16 = int_to_ptr.hbm [resolvable:$true] %s15
      %s17 = sshll.u32 [#allocation2], 4
      %s18 = int_to_ptr.vmem [resolvable:$true] %s17
      %23 = dma.hbm_to_vmem [thread:$0]  %s16, 2048, %s18, [#allocation3], 128, 128, 8
    $region9: #{linear_forward.1} parent=1 // pred_fallthru
      _
    // Predicated region
    $region10: #{linear_forward.1} parent=1 // pred_check
      _
    $region11: #{linear_forward.1} parent=1 // pred_check_branch
      %25 = sbr.rel (0) target = $region13
    $region12: #{linear_forward.1} parent=1 // pred_region
      _
    $region13: #{linear_forward.1} parent=1 // pred_fallthru
      _
    // Predicated region
    $region14: #{linear_forward.1} parent=1 // pred_check
      _
    $region15: #{linear_forward.1} parent=1 // pred_check_branch
      %27 = sbr.rel (0) target = $region17
    $region16: #{linear_forward.1} parent=1 // pred_region
      %29 = dma.done [#allocation3], 2048
    $region17: #{linear_forward.1} parent=1 // pred_fallthru
      _
    %v30 = vld [vmem:[%s0] sm:$0xff]
    %v31 = vld [vmem:[#allocation2] sm:$0xff]
    %v32 = vld [vmem:[#allocation2 + $0x8] sm:$0xff]
    %v33 = vld [vmem:[#allocation2 + $0x10] sm:$0xff]
    %v34 = vld [vmem:[#allocation2 + $0x18] sm:$0xff]
    %v35 = vld [vmem:[#allocation2 + $0x20] sm:$0xff]
    %v36 = vld [vmem:[#allocation2 + $0x28] sm:$0xff]
    %v37 = vld [vmem:[#allocation2 + $0x30] sm:$0xff]
    %v38 = vld [vmem:[#allocation2 + $0x38] sm:$0xff]
    %v39 = vld [vmem:[#allocation2 + $0x40] sm:$0xff]
    %v40 = vld [vmem:[#allocation2 + $0x48] sm:$0xff]
    %v41 = vld [vmem:[#allocation2 + $0x50] sm:$0xff]
    %v42 = vld [vmem:[#allocation2 + $0x58] sm:$0xff]
    %v43 = vld [vmem:[#allocation2 + $0x60] sm:$0xff]
    %v44 = vld [vmem:[#allocation2 + $0x68] sm:$0xff]
    %v45 = vld [vmem:[#allocation2 + $0x70] sm:$0xff]
    %v46 = vld [vmem:[#allocation2 + $0x78] sm:$0xff]
    %v47 = vld [vmem:[%s2] sm:$0x1]
    %v49 = vperm.slane %v47, 0
    %51 = vmatpush.msra.mxu0 %v46
    %52 = vmatpush.msra.mxu0 %v45
    %53 = vmatpush.msra.mxu0 %v44
    %54 = vmatpush.msra.mxu0 %v43
    %55 = vmatpush.msra.mxu0 %v42
    %56 = vmatpush.msra.mxu0 %v41
    %57 = vmatpush.msra.mxu0 %v40
    %58 = vmatpush.msra.mxu0 %v39
    %59 = vmatpush.msra.mxu0 %v38
    %60 = vmatpush.msra.mxu0 %v37
    %61 = vmatpush.msra.mxu0 %v36
    %62 = vmatpush.msra.mxu0 %v35
    %63 = vmatpush.msra.mxu0 %v34
    %64 = vmatpush.msra.mxu0 %v33
    %65 = vmatpush.msra.mxu0 %v32
    %66 = vmatpush.msra.mxu0 %v31
    %67 = vmatmul.f32.gmra.mxu0 %v30
    %v68 = vpop.f32.mrf.mxu0
    %v69 = vadd.f32 %v49, %v68
    %70 = vdwg.mxu0
    %71 = vst [vmem:[%s3] sm:$0xff] %v69
    // Predicated region
    $region18: #{linear_forward.1} parent=1 // pred_check
      _
    $region19: #{linear_forward.1} parent=1 // pred_check_branch
      %73 = sbr.rel (0) target = $region21
    $region20: #{linear_forward.1} parent=1 // pred_region
      _
    $region21: #{linear_forward.1} parent=1 // pred_fallthru
      _
    // Predicated region
    $region22: #{linear_forward.1} parent=1 // pred_check
      _
    $region23: #{linear_forward.1} parent=1 // pred_check_branch
      %75 = sbr.rel (0) target = $region25
    $region24: #{linear_forward.1} parent=1 // pred_region
      _
    $region25: #{linear_forward.1} parent=1 // pred_fallthru
      _
    %76 = vsyncpa [#allocation3], 1

</llo_original>
